<compile_context>
chip_gen: v5e
topology: v5e:2x2
jax: 0.10.0
libtpu: 0.0.40
codegen_flags: <defaults>
</compile_context>

<pallas_src>
import math

import jax
import jax.numpy as jnp
from jax.experimental import pallas as pl
from jax.experimental.pallas import tpu as pltpu

NOISE_DIM = 10
H1 = 128
H2 = 256
OUT = 96

MAX_TB = 1024       # max batch-tile rows per grid step


def _round_up(x, m):
    return ((x + m - 1) // m) * m


def _brady_tachy_kernel(x_ref, w1_ref, b1_ref, w2_ref, b2_ref, w3_ref, b3_ref,
                        o_ref):
    """One batch tile of the MLP: Linear->ReLU->Linear->ReLU->Linear->Sigmoid."""
    x = x_ref[...].astype(jnp.bfloat16)                         # (TB, 10)

    h1 = jnp.dot(x, w1_ref[...],
                 preferred_element_type=jnp.float32) + b1_ref[...]
    h1 = jnp.maximum(h1, 0.0)                                   # (TB, 128) f32

    h2 = jnp.dot(h1.astype(jnp.bfloat16), w2_ref[...],
                 preferred_element_type=jnp.float32) + b2_ref[...]
    h2 = jnp.maximum(h2, 0.0)                                   # (TB, 256) f32

    z = jnp.dot(h2.astype(jnp.bfloat16), w3_ref[...],
                preferred_element_type=jnp.float32) + b3_ref[...]
    # sigmoid(z) == 0.5 * tanh(0.5 * z) + 0.5 : a single EUP op per element.
    o_ref[...] = (0.5 * jnp.tanh(0.5 * z) + 0.5).astype(o_ref.dtype)


def prepare_params(params):
    """One-time conversion of f32 PyTorch-style params to TPU-friendly dtypes.

    Call once and reuse; keeps per-forward wrapper work to ~zero.
    """
    return {
        "w1": jnp.asarray(params["w1"], jnp.bfloat16),                 # (10, 128)
        "b1": jnp.asarray(params["b1"], jnp.float32).reshape(1, H1),   # (1, 128)
        "w2": jnp.asarray(params["w2"], jnp.bfloat16),                 # (128, 256)
        "b2": jnp.asarray(params["b2"], jnp.float32).reshape(1, H2),   # (1, 256)
        "w3": jnp.asarray(params["w3"], jnp.bfloat16),                 # (256, 96)
        "b3": jnp.asarray(params["b3"], jnp.float32).reshape(1, OUT),  # (1, 96)
    }


def brady_tachy_generator(noise, prepared, *, out_dtype=jnp.float32):
    """Generator forward pass as a Pallas kernel.

    Args:
      noise: (B, NOISE_DIM) float32 array.
      prepared: output of `prepare_params()` (bf16 weights, f32 biases).
      out_dtype: output dtype; jnp.bfloat16 halves output HBM traffic on
        v6e/v7x (values are in [0, 1], abs error < 4e-3).

    Returns:
      (B, 96) array in [0, 1].
    """
    b = noise.shape[0]

    # Tile the batch so there are >=2 grid steps whenever B > 8 (v7x has two
    # TensorCores and "parallel" grid axes shard across them), capped at
    # MAX_TB rows per step and rounded to the sublane multiple of 8.
    tb = min(MAX_TB, max(8, _round_up(pl.cdiv(max(b, 1), 2), 8)))
    b_pad = _round_up(max(b, 1), tb)
    grid = (b_pad // tb,)

    # Pad batch rows only when necessary (tiny copy; extra rows are garbage
    # and sliced away below).
    if b_pad != b:
        noise_in = jnp.zeros((b_pad, NOISE_DIM), noise.dtype).at[:b].set(noise)
    else:
        noise_in = noise

    const = lambda shape: pl.BlockSpec(shape, lambda i: (0, 0))

    flops = 2 * b_pad * (NOISE_DIM * H1 + H1 * H2 + H2 * OUT)
    transcendentals = b_pad * OUT                    # one tanh per output
    bytes_accessed = (
        noise_in.size * 4 + b_pad * OUT * jnp.dtype(out_dtype).itemsize
        + sum(prepared[k].size * 2 for k in ("w1", "w2", "w3"))
        + sum(prepared[k].size * 4 for k in ("b1", "b2", "b3")))

    out = pl.pallas_call(
        _brady_tachy_kernel,
        out_shape=jax.ShapeDtypeStruct((b_pad, OUT), out_dtype),
        grid=grid,
        in_specs=[
            pl.BlockSpec((tb, NOISE_DIM), lambda i: (i, 0)),  # noise tile
            const((NOISE_DIM, H1)),                           # w1 (resident)
            const((1, H1)),                                   # b1
            const((H1, H2)),                                  # w2
            const((1, H2)),                                   # b2
            const((H2, OUT)),                                 # w3
            const((1, OUT)),                                  # b3
        ],
        out_specs=pl.BlockSpec((tb, OUT), lambda i: (i, 0)),
        compiler_params=pltpu.CompilerParams(
            dimension_semantics=("parallel",),
            vmem_limit_bytes=32 << 20,
        ),
        cost_estimate=pl.CostEstimate(
            flops=flops,
            transcendentals=transcendentals,
            bytes_accessed=bytes_accessed,
        ),
    )(noise_in, prepared["w1"], prepared["b1"], prepared["w2"],
      prepared["b2"], prepared["w3"], prepared["b3"])

    if b_pad != b:
        out = out[:b]
    return out


def init_params(key):
    """Deterministic init matching nn.Linear's default U(-1/sqrt(fan_in), ...)."""
    ks = jax.random.split(key, 6)

    def linear(kw, kb, fan_in, fan_out):
        bound = 1.0 / math.sqrt(fan_in)
        w = jax.random.uniform(kw, (fan_in, fan_out), jnp.float32, -bound, bound)
        bias = jax.random.uniform(kb, (1, fan_out), jnp.float32, -bound, bound)
        return w, bias

    w1, b1 = linear(ks[0], ks[1], NOISE_DIM, H1)
    w2, b2 = linear(ks[2], ks[3], H1, H2)
    w3, b3 = linear(ks[4], ks[5], H2, OUT)
    return {"w1": w1, "b1": b1, "w2": w2, "b2": b2, "w3": w3, "b3": b3}


def reference_forward(noise, params):
    """Pure-JAX f32 reference identical to the PyTorch forward."""
    h1 = jnp.maximum(noise @ params["w1"] + params["b1"], 0.0)
    h2 = jnp.maximum(h1 @ params["w2"] + params["b2"], 0.0)
    return jax.nn.sigmoid(h2 @ params["w3"] + params["b3"])


if __name__ == "__main__":
    key = jax.random.PRNGKey(0)
    pkey, nkey = jax.random.split(key)

    params = init_params(pkey)
    prepared = prepare_params(params)          # one-time dtype conversion

    batch = 8
    noise = jax.random.normal(nkey, (batch, NOISE_DIM), jnp.float32)

    out = brady_tachy_generator(noise, prepared)
    out = jax.block_until_ready(out)

    ref = reference_forward(noise, params)
    assert out.shape == (batch, OUT), out.shape
    # bf16 MXU operands -> relaxed tolerance vs pure-f32 reference.
    max_err = float(jnp.max(jnp.abs(out - ref)))
    assert max_err < 2e-2, max_err

    # Also exercise a non-multiple-of-8 batch (row padding path) once.
    noise2 = jax.random.normal(jax.random.PRNGKey(1), (3, NOISE_DIM), jnp.float32)
    out2 = jax.block_until_ready(brady_tachy_generator(noise2, prepared))
    ref2 = reference_forward(noise2, params)
    assert out2.shape == (3, OUT)
    assert float(jnp.max(jnp.abs(out2 - ref2))) < 2e-2

    print("KERNEL_OK")
</pallas_src>

<mosaic_0001>
module attributes {stable_mosaic.version = 11 : i64} {
  func.func @_brady_tachy_kernel(%arg0: i32, %arg1: memref<8x10xf32, #tpu.memory_space<vmem>>, %arg2: memref<10x128xbf16, #tpu.memory_space<vmem>>, %arg3: memref<1x128xf32, #tpu.memory_space<vmem>>, %arg4: memref<128x256xbf16, #tpu.memory_space<vmem>>, %arg5: memref<1x256xf32, #tpu.memory_space<vmem>>, %arg6: memref<256x96xbf16, #tpu.memory_space<vmem>>, %arg7: memref<1x96xf32, #tpu.memory_space<vmem>>, %arg8: memref<8x96xf32, #tpu.memory_space<vmem>>) attributes {dimension_semantics = [#tpu.dimension_semantics<parallel>], iteration_bounds = array<i64: 1>, scalar_prefetch = 0 : i64, scratch_operands = 0 : i64, tpu.core_type = #tpu.core_type<tc>, window_params = [{transform_indices = @transform_0, window_bounds = array<i64: 8, 10>}, {pipeline_mode = #tpu.pipeline_mode<synchronous>, transform_indices = @transform_1, window_bounds = array<i64: 10, 128>}, {pipeline_mode = #tpu.pipeline_mode<synchronous>, transform_indices = @transform_2, window_bounds = array<i64: 1, 128>}, {pipeline_mode = #tpu.pipeline_mode<synchronous>, transform_indices = @transform_3, window_bounds = array<i64: 128, 256>}, {pipeline_mode = #tpu.pipeline_mode<synchronous>, transform_indices = @transform_4, window_bounds = array<i64: 1, 256>}, {pipeline_mode = #tpu.pipeline_mode<synchronous>, transform_indices = @transform_5, window_bounds = array<i64: 256, 96>}, {pipeline_mode = #tpu.pipeline_mode<synchronous>, transform_indices = @transform_6, window_bounds = array<i64: 1, 96>}, {transform_indices = @transform_7, window_bounds = array<i64: 8, 96>}]} {
    %c0 = arith.constant 0 : index
    %c0_0 = arith.constant 0 : index
    %0 = vector.load %arg1[%c0, %c0_0] : memref<8x10xf32, #tpu.memory_space<vmem>>, vector<8x10xf32>
    %1 = arith.truncf %0 : vector<8x10xf32> to vector<8x10xbf16>
    %c0_1 = arith.constant 0 : index
    %c0_2 = arith.constant 0 : index
    %2 = vector.load %arg2[%c0_1, %c0_2] : memref<10x128xbf16, #tpu.memory_space<vmem>>, vector<10x128xbf16>
    %cst = arith.constant dense<0.000000e+00> : vector<8x128xf32>
    %3 = tpu.matmul %1, %2, %cst {dimension_numbers = #tpu.dot_dimension_numbers<[1], [0], [0], [1], [0, 0, 1, 1], [], []>} : vector<8x10xbf16>, vector<10x128xbf16>, vector<8x128xf32> -> vector<8x128xf32>
    %c0_3 = arith.constant 0 : index
    %c0_4 = arith.constant 0 : index
    %4 = vector.load %arg3[%c0_3, %c0_4] : memref<1x128xf32, #tpu.memory_space<vmem>>, vector<1x128xf32>
    %5 = vector.broadcast %4 : vector<1x128xf32> to vector<8x128xf32>
    %6 = arith.addf %3, %5 : vector<8x128xf32>
    %cst_5 = arith.constant 0.000000e+00 : f32
    %7 = vector.broadcast %cst_5 : f32 to vector<8x128xf32>
    %8 = arith.maximumf %6, %7 : vector<8x128xf32>
    %9 = arith.truncf %8 : vector<8x128xf32> to vector<8x128xbf16>
    %c0_6 = arith.constant 0 : index
    %c0_7 = arith.constant 0 : index
    %10 = vector.load %arg4[%c0_6, %c0_7] : memref<128x256xbf16, #tpu.memory_space<vmem>>, vector<128x256xbf16>
    %cst_8 = arith.constant dense<0.000000e+00> : vector<8x256xf32>
    %11 = tpu.matmul %9, %10, %cst_8 {dimension_numbers = #tpu.dot_dimension_numbers<[1], [0], [0], [1], [0, 0, 1, 1], [], []>} : vector<8x128xbf16>, vector<128x256xbf16>, vector<8x256xf32> -> vector<8x256xf32>
    %c0_9 = arith.constant 0 : index
    %c0_10 = arith.constant 0 : index
    %12 = vector.load %arg5[%c0_9, %c0_10] : memref<1x256xf32, #tpu.memory_space<vmem>>, vector<1x256xf32>
    %13 = vector.broadcast %12 : vector<1x256xf32> to vector<8x256xf32>
    %14 = arith.addf %11, %13 : vector<8x256xf32>
    %cst_11 = arith.constant 0.000000e+00 : f32
    %15 = vector.broadcast %cst_11 : f32 to vector<8x256xf32>
    %16 = arith.maximumf %14, %15 : vector<8x256xf32>
    %17 = arith.truncf %16 : vector<8x256xf32> to vector<8x256xbf16>
    %c0_12 = arith.constant 0 : index
    %c0_13 = arith.constant 0 : index
    %18 = vector.load %arg6[%c0_12, %c0_13] : memref<256x96xbf16, #tpu.memory_space<vmem>>, vector<256x96xbf16>
    %cst_14 = arith.constant dense<0.000000e+00> : vector<8x96xf32>
    %19 = tpu.matmul %17, %18, %cst_14 {dimension_numbers = #tpu.dot_dimension_numbers<[1], [0], [0], [1], [0, 0, 1, 1], [], []>} : vector<8x256xbf16>, vector<256x96xbf16>, vector<8x96xf32> -> vector<8x96xf32>
    %c0_15 = arith.constant 0 : index
    %c0_16 = arith.constant 0 : index
    %20 = vector.load %arg7[%c0_15, %c0_16] : memref<1x96xf32, #tpu.memory_space<vmem>>, vector<1x96xf32>
    %21 = vector.broadcast %20 : vector<1x96xf32> to vector<8x96xf32>
    %22 = arith.addf %19, %21 : vector<8x96xf32>
    %cst_17 = arith.constant 5.000000e-01 : f32
    %23 = vector.broadcast %cst_17 : f32 to vector<8x96xf32>
    %24 = arith.mulf %23, %22 : vector<8x96xf32>
    %25 = math.tanh %24 : vector<8x96xf32>
    %cst_18 = arith.constant 5.000000e-01 : f32
    %26 = vector.broadcast %cst_18 : f32 to vector<8x96xf32>
    %27 = arith.mulf %26, %25 : vector<8x96xf32>
    %cst_19 = arith.constant 5.000000e-01 : f32
    %28 = vector.broadcast %cst_19 : f32 to vector<8x96xf32>
    %29 = arith.addf %27, %28 : vector<8x96xf32>
    %c0_20 = arith.constant 0 : index
    %c0_21 = arith.constant 0 : index
    %30 = vector.load %arg8[%c0_20, %c0_21] : memref<8x96xf32, #tpu.memory_space<vmem>>, vector<8x96xf32>
    tpu.vector_store %arg8[%c0_20, %c0_21], %29 {strides = array<i32>} : memref<8x96xf32, #tpu.memory_space<vmem>>, vector<8x96xf32>,
    return
  }
  func.func @transform_0(%arg0: i32) -> (i32, i32) {
    %c0_i32 = arith.constant 0 : i32
    %c0_i32_0 = arith.constant 0 : i32
    return %arg0, %c0_i32 : i32, i32
  }
  func.func @transform_1(%arg0: i32) -> (i32, i32) {
    %c0_i32 = arith.constant 0 : i32
    %c0_i32_0 = arith.constant 0 : i32
    %c0_i32_1 = arith.constant 0 : i32
    return %c0_i32, %c0_i32_0 : i32, i32
  }
  func.func @transform_2(%arg0: i32) -> (i32, i32) {
    %c0_i32 = arith.constant 0 : i32
    %c0_i32_0 = arith.constant 0 : i32
    %c0_i32_1 = arith.constant 0 : i32
    return %c0_i32, %c0_i32_0 : i32, i32
  }
  func.func @transform_3(%arg0: i32) -> (i32, i32) {
    %c0_i32 = arith.constant 0 : i32
    %c0_i32_0 = arith.constant 0 : i32
    %c0_i32_1 = arith.constant 0 : i32
    return %c0_i32, %c0_i32_0 : i32, i32
  }
  func.func @transform_4(%arg0: i32) -> (i32, i32) {
    %c0_i32 = arith.constant 0 : i32
    %c0_i32_0 = arith.constant 0 : i32
    %c0_i32_1 = arith.constant 0 : i32
    return %c0_i32, %c0_i32_0 : i32, i32
  }
  func.func @transform_5(%arg0: i32) -> (i32, i32) {
    %c0_i32 = arith.constant 0 : i32
    %c0_i32_0 = arith.constant 0 : i32
    %c0_i32_1 = arith.constant 0 : i32
    return %c0_i32, %c0_i32_0 : i32, i32
  }
  func.func @transform_6(%arg0: i32) -> (i32, i32) {
    %c0_i32 = arith.constant 0 : i32
    %c0_i32_0 = arith.constant 0 : i32
    %c0_i32_1 = arith.constant 0 : i32
    return %c0_i32, %c0_i32_0 : i32, i32
  }
  func.func @transform_7(%arg0: i32) -> (i32, i32) {
    %c0_i32 = arith.constant 0 : i32
    %c0_i32_0 = arith.constant 0 : i32
    return %arg0, %c0_i32 : i32, i32
  }
}

</mosaic_0001>

<llo_original>
// kernel: tpu_custom_call.1
$region0: #{tpu_custom_call.1}
  #allocation0 [shape = 'u32[]', space=smem, size = 0x4, offset = 0x4, fixed_abs, tag = 'smem constant byte address 0x4 - core index']
  #allocation1 [shape = 'u32[72,128]{1,0:T(1,128)}', space=vmem, size = 0x9000, scoped, tag = 'internal scratch']
  %s0 = inlined_call_operand.vmem [shape: f32[8,10], index: 0, kind: input, shape index: {}]
  %s1 = inlined_call_operand.vmem [shape: bf16[10,128], index: 1, kind: input, shape index: {}]
  %s2 = inlined_call_operand.vmem [shape: f32[1,128], index: 2, kind: input, shape index: {}]
  %s3 = inlined_call_operand.vmem [shape: bf16[128,256], index: 3, kind: input, shape index: {}]
  %s4 = inlined_call_operand.vmem [shape: f32[1,256], index: 4, kind: input, shape index: {}]
  %s5 = inlined_call_operand.vmem [shape: bf16[256,96], index: 5, kind: input, shape index: {}]
  %s6 = inlined_call_operand.vmem [shape: f32[1,96], index: 6, kind: input, shape index: {}]
  %s7 = inlined_call_operand.hbm [shape: f32[8,96], index: 7, kind: output, shape index: {}]
  %s8 = sld [smem:[#allocation0]]
  $region38: #{tpu_custom_call.1} parent=0
    _
  %s10 = ssub.s32 1, %s8
  %s11 = scalar_select 0, %s10, %s8
  $region1: #{tpu_custom_call.1} parent=0
    #allocation2 [shape = 'u8[4096]{0}', space=vmem, size = 0x1000, scoped, tag = 'output window, operand 0, single buffered']
    #allocation3 [shape = 's32[1]{0}', space=sflag, size = 0x4, scoped, tag = 'scoped memory for tpu_custom_call.1']
    %12 = vsyncpa [#allocation3], 0
    // Predicated region
    $region2: #{tpu_custom_call.1} parent=1 // pred_check
      _
    $region3: #{tpu_custom_call.1} parent=1 // pred_check_branch
      %14 = sbr.rel (0) target = $region5
    $region4: #{tpu_custom_call.1} parent=1 // pred_region
      _
    $region5: #{tpu_custom_call.1} parent=1 // pred_fallthru
      _
    // Predicated region
    $region6: #{tpu_custom_call.1} parent=1 // pred_check
      _
    $region7: #{tpu_custom_call.1} parent=1 // pred_check_branch
      %16 = sbr.rel (0) target = $region9
    $region8: #{tpu_custom_call.1} parent=1 // pred_region
      _
    $region9: #{tpu_custom_call.1} parent=1 // pred_fallthru
      _
    // Predicated region
    $region10: #{tpu_custom_call.1} parent=1 // pred_check
      _
    $region11: #{tpu_custom_call.1} parent=1 // pred_check_branch
      %18 = sbr.rel (0) target = $region13
    $region12: #{tpu_custom_call.1} parent=1 // pred_region
      _
    $region13: #{tpu_custom_call.1} parent=1 // pred_fallthru
      _
    // Predicated region
    $region14: #{tpu_custom_call.1} parent=1 // pred_check
      _
    $region15: #{tpu_custom_call.1} parent=1 // pred_check_branch
      %20 = sbr.rel (0) target = $region17
    $region16: #{tpu_custom_call.1} parent=1 // pred_region
      _
    $region17: #{tpu_custom_call.1} parent=1 // pred_fallthru
      _
    // Predicated region
    $region18: #{tpu_custom_call.1} parent=1 // pred_check
      _
    $region19: #{tpu_custom_call.1} parent=1 // pred_check_branch
      %22 = sbr.rel (0) target = $region21
    $region20: #{tpu_custom_call.1} parent=1 // pred_region
      _
    $region21: #{tpu_custom_call.1} parent=1 // pred_fallthru
      _
    // Predicated region
    $region22: #{tpu_custom_call.1} parent=1 // pred_check
      _
    $region23: #{tpu_custom_call.1} parent=1 // pred_check_branch
      %24 = sbr.rel (0) target = $region25
    $region24: #{tpu_custom_call.1} parent=1 // pred_region
      _
    $region25: #{tpu_custom_call.1} parent=1 // pred_fallthru
      _
    // Predicated region
    $region26: #{tpu_custom_call.1} parent=1 // pred_check
      _
    $region27: #{tpu_custom_call.1} parent=1 // pred_check_branch
      %26 = sbr.rel (0) target = $region29
    $region28: #{tpu_custom_call.1} parent=1 // pred_region
      _
    $region29: #{tpu_custom_call.1} parent=1 // pred_fallthru
      _
    %v28 = vld [vmem:[%s0] sm:$0xff]
    %v29 = vpack.c.bf16 %v28, %v28
    %v30 = vld [vmem:[%s1] sm:$0xf]
    %v31 = vld [vmem:[%s1 + $0x4] sm:$0x1]
    %v32 = vld [vmem:[%s2] sm:$0x1]
    %v34 = vperm.slane %v32, 0
    %v38 = vunpack.c.l.b16 %v30
    %v39 = vunpack.c.l.b16 %v31
    %v40 = vpack.c.b16 %v39, %v38
    %vm41 = vcmask 80896
    %v43 = vsel %vm41, %v29, 0
    %vm45 = vcmask 1044480
    %v47 = vsel %vm45, %v40, 0
    %49 = vmatpush.bf16.msra.mxu0 0
    %50 = vmatpush.bf16.msra.mxu0 0
    %51 = vmatpush.bf16.msra.mxu0 0
    %52 = vmatpush.bf16.msra.mxu0 0
    %53 = vmatpush.bf16.msra.mxu0 0
    %54 = vmatpush.bf16.msra.mxu0 0
    %55 = vmatpush.bf16.msra.mxu0 0
    %56 = vmatpush.bf16.msra.mxu0 %v47
    %57 = vmatmul.bf16.gmra.mxu0 %v43
    %v58 = vpop.f32.mrf.mxu0
    %v59 = vadd.f32 %v34, %v58
    %v60 = vpop.f32.mrf.mxu0
    %61 = vdwg.mxu0
    %v62 = vmax.f32 %v59, 0.0
    %v63 = vpack.c.bf16 %v62, %v62
    %v64 = vld [vmem:[%s3] sm:$0xff]
    %v65 = vld [vmem:[%s3 + $0x8] sm:$0xff]
    %v66 = vld [vmem:[%s3 + $0x10] sm:$0xff]
    %v67 = vld [vmem:[%s3 + $0x18] sm:$0xff]
    %v68 = vld [vmem:[%s3 + $0x20] sm:$0xff]
    %v69 = vld [vmem:[%s3 + $0x28] sm:$0xff]
    %v70 = vld [vmem:[%s3 + $0x30] sm:$0xff]
    %v71 = vld [vmem:[%s3 + $0x38] sm:$0xff]
    %v72 = vld [vmem:[%s3 + $0x40] sm:$0xff]
    %v73 = vld [vmem:[%s3 + $0x48] sm:$0xff]
    %v74 = vld [vmem:[%s3 + $0x50] sm:$0xff]
    %v75 = vld [vmem:[%s3 + $0x58] sm:$0xff]
    %v76 = vld [vmem:[%s3 + $0x60] sm:$0xff]
    %v77 = vld [vmem:[%s3 + $0x68] sm:$0xff]
    %v78 = vld [vmem:[%s3 + $0x70] sm:$0xff]
    %v79 = vld [vmem:[%s3 + $0x78] sm:$0xff]
    %v80 = vld [vmem:[%s4] sm:$0x3]
    %v82 = vperm.slane %v80, 0
    %v83 = vperm.slane %v80, 1
    %v102 = vunpack.c.l.b16 %v64
    %v103 = vunpack.c.h.b16 %v64
    %v104 = vunpack.c.l.b16 %v65
    %v105 = vunpack.c.h.b16 %v65
    %v106 = vunpack.c.l.b16 %v66
    %v107 = vunpack.c.h.b16 %v66
    %v108 = vunpack.c.l.b16 %v67
    %v109 = vunpack.c.h.b16 %v67
    %v110 = vunpack.c.l.b16 %v68
    %v111 = vunpack.c.h.b16 %v68
    %v112 = vunpack.c.l.b16 %v69
    %v113 = vunpack.c.h.b16 %v69
    %v114 = vunpack.c.l.b16 %v70
    %v115 = vunpack.c.h.b16 %v70
    %v116 = vunpack.c.l.b16 %v71
    %v117 = vunpack.c.h.b16 %v71
    %v118 = vunpack.c.l.b16 %v72
    %v119 = vunpack.c.h.b16 %v72
    %v120 = vunpack.c.l.b16 %v73
    %v121 = vunpack.c.h.b16 %v73
    %v122 = vunpack.c.l.b16 %v74
    %v123 = vunpack.c.h.b16 %v74
    %v124 = vunpack.c.l.b16 %v75
    %v125 = vunpack.c.h.b16 %v75
    %v126 = vunpack.c.l.b16 %v76
    %v127 = vunpack.c.h.b16 %v76
    %v128 = vunpack.c.l.b16 %v77
    %v129 = vunpack.c.h.b16 %v77
    %v130 = vunpack.c.l.b16 %v78
    %v131 = vunpack.c.h.b16 %v78
    %v132 = vunpack.c.l.b16 %v79
    %v133 = vunpack.c.h.b16 %v79
    %v134 = vpack.c.b16 %v104, %v102
    %v135 = vpack.c.b16 %v105, %v103
    %v136 = vpack.c.b16 %v108, %v106
    %v137 = vpack.c.b16 %v109, %v107
    %v138 = vpack.c.b16 %v112, %v110
    %v139 = vpack.c.b16 %v113, %v111
    %v140 = vpack.c.b16 %v116, %v114
    %v141 = vpack.c.b16 %v117, %v115
    %v142 = vpack.c.b16 %v120, %v118
    %v143 = vpack.c.b16 %v121, %v119
    %v144 = vpack.c.b16 %v124, %v122
    %v145 = vpack.c.b16 %v125, %v123
    %v146 = vpack.c.b16 %v128, %v126
    %v147 = vpack.c.b16 %v129, %v127
    %v148 = vpack.c.b16 %v132, %v130
    %v149 = vpack.c.b16 %v133, %v131
    %166 = vmatpush.bf16.msra.mxu0 %v148
    %167 = vmatpush.bf16.msra.mxu0 %v146
    %168 = vmatpush.bf16.msra.mxu0 %v144
    %169 = vmatpush.bf16.msra.mxu0 %v142
    %170 = vmatpush.bf16.msra.mxu0 %v140
    %171 = vmatpush.bf16.msra.mxu0 %v138
    %172 = vmatpush.bf16.msra.mxu0 %v136
    %173 = vmatpush.bf16.msra.mxu0 %v134
    %174 = vmatmul.bf16.gmra.mxu0 %v63
    %v175 = vpop.f32.mrf.mxu0
    %v176 = vadd.f32 %v82, %v175
    %v177 = vpop.f32.mrf.mxu0
    %178 = vdwg.mxu0
    %179 = vmatpush.bf16.msra.mxu0 %v149
    %180 = vmatpush.bf16.msra.mxu0 %v147
    %181 = vmatpush.bf16.msra.mxu0 %v145
    %182 = vmatpush.bf16.msra.mxu0 %v143
    %183 = vmatpush.bf16.msra.mxu0 %v141
    %184 = vmatpush.bf16.msra.mxu0 %v139
    %185 = vmatpush.bf16.msra.mxu0 %v137
    %186 = vmatpush.bf16.msra.mxu0 %v135
    %187 = vmatmul.bf16.gmra.mxu0 %v63
    %v188 = vpop.f32.mrf.mxu0
    %v189 = vadd.f32 %v83, %v188
    %v190 = vpop.f32.mrf.mxu0
    %191 = vdwg.mxu0
    %v192 = vmax.f32 %v176, 0.0
    %v193 = vmax.f32 %v189, 0.0
    %v194 = vpack.c.bf16 %v192, %v192
    %v195 = vpack.c.bf16 %v193, %v193
    %v196 = vld [vmem:[%s5] sm:$0xf]
    %v197 = vld [vmem:[%s5 + $0x4] sm:$0xf]
    %v198 = vld [vmem:[%s5 + $0x8] sm:$0xf]
    %v199 = vld [vmem:[%s5 + $0xc] sm:$0xf]
    %v200 = vld [vmem:[%s5 + $0x10] sm:$0xf]
    %v201 = vld [vmem:[%s5 + $0x14] sm:$0xf]
    %v202 = vld [vmem:[%s5 + $0x18] sm:$0xf]
    %v203 = vld [vmem:[%s5 + $0x1c] sm:$0xf]
    %v204 = vld [vmem:[%s5 + $0x20] sm:$0xf]
    %v205 = vld [vmem:[%s5 + $0x24] sm:$0xf]
    %v206 = vld [vmem:[%s5 + $0x28] sm:$0xf]
    %v207 = vld [vmem:[%s5 + $0x2c] sm:$0xf]
    %v208 = vld [vmem:[%s5 + $0x30] sm:$0xf]
    %v209 = vld [vmem:[%s5 + $0x34] sm:$0xf]
    %v210 = vld [vmem:[%s5 + $0x38] sm:$0xf]
    %v211 = vld [vmem:[%s5 + $0x3c] sm:$0xf]
    %v212 = vld [vmem:[%s5 + $0x40] sm:$0xf]
    %v213 = vld [vmem:[%s5 + $0x44] sm:$0xf]
    %v214 = vld [vmem:[%s5 + $0x48] sm:$0xf]
    %v215 = vld [vmem:[%s5 + $0x4c] sm:$0xf]
    %v216 = vld [vmem:[%s5 + $0x50] sm:$0xf]
    %v217 = vld [vmem:[%s5 + $0x54] sm:$0xf]
    %v218 = vld [vmem:[%s5 + $0x58] sm:$0xf]
    %v219 = vld [vmem:[%s5 + $0x5c] sm:$0xf]
    %v220 = vld [vmem:[%s5 + $0x60] sm:$0xf]
    %v221 = vld [vmem:[%s5 + $0x64] sm:$0xf]
    %v222 = vld [vmem:[%s5 + $0x68] sm:$0xf]
    %v223 = vld [vmem:[%s5 + $0x6c] sm:$0xf]
    %v224 = vld [vmem:[%s5 + $0x70] sm:$0xf]
    %v225 = vld [vmem:[%s5 + $0x74] sm:$0xf]
    %v226 = vld [vmem:[%s5 + $0x78] sm:$0xf]
    %v227 = vld [vmem:[%s5 + $0x7c] sm:$0xf]
    %v228 = vld [vmem:[%s6] sm:$0x1]
    %v230 = vperm.slane %v228, 0
    %v264 = vunpack.c.l.b16 %v196
    %v265 = vunpack.c.l.b16 %v197
    %v266 = vunpack.c.l.b16 %v198
    %v267 = vunpack.c.l.b16 %v199
    %v268 = vunpack.c.l.b16 %v200
    %v269 = vunpack.c.l.b16 %v201
    %v270 = vunpack.c.l.b16 %v202
    %v271 = vunpack.c.l.b16 %v203
    %v272 = vunpack.c.l.b16 %v204
    %v273 = vunpack.c.l.b16 %v205
    %v274 = vunpack.c.l.b16 %v206
    %v275 = vunpack.c.l.b16 %v207
    %v276 = vunpack.c.l.b16 %v208
    %v277 = vunpack.c.l.b16 %v209
    %v278 = vunpack.c.l.b16 %v210
    %v279 = vunpack.c.l.b16 %v211
    %v280 = vunpack.c.l.b16 %v212
    %v281 = vunpack.c.l.b16 %v213
    %v282 = vunpack.c.l.b16 %v214
    %v283 = vunpack.c.l.b16 %v215
    %v284 = vunpack.c.l.b16 %v216
    %v285 = vunpack.c.l.b16 %v217
    %v286 = vunpack.c.l.b16 %v218
    %v287 = vunpack.c.l.b16 %v219
    %v288 = vunpack.c.l.b16 %v220
    %v289 = vunpack.c.l.b16 %v221
    %v290 = vunpack.c.l.b16 %v222
    %v291 = vunpack.c.l.b16 %v223
    %v292 = vunpack.c.l.b16 %v224
    %v293 = vunpack.c.l.b16 %v225
    %v294 = vunpack.c.l.b16 %v226
    %v295 = vunpack.c.l.b16 %v227
    %v296 = vpack.c.b16 %v265, %v264
    %v297 = vpack.c.b16 %v267, %v266
    %v298 = vpack.c.b16 %v269, %v268
    %v299 = vpack.c.b16 %v271, %v270
    %v300 = vpack.c.b16 %v273, %v272
    %v301 = vpack.c.b16 %v275, %v274
    %v302 = vpack.c.b16 %v277, %v276
    %v303 = vpack.c.b16 %v279, %v278
    %v304 = vpack.c.b16 %v281, %v280
    %v305 = vpack.c.b16 %v283, %v282
    %v306 = vpack.c.b16 %v285, %v284
    %v307 = vpack.c.b16 %v287, %v286
    %v308 = vpack.c.b16 %v289, %v288
    %v309 = vpack.c.b16 %v291, %v290
    %v310 = vpack.c.b16 %v293, %v292
    %v311 = vpack.c.b16 %v295, %v294
    %328 = vmatpush.bf16.msra.mxu0 %v303
    %329 = vmatpush.bf16.msra.mxu0 %v302
    %330 = vmatpush.bf16.msra.mxu0 %v301
    %331 = vmatpush.bf16.msra.mxu0 %v300
    %332 = vmatpush.bf16.msra.mxu0 %v299
    %333 = vmatpush.bf16.msra.mxu0 %v298
    %334 = vmatpush.bf16.msra.mxu0 %v297
    %335 = vmatpush.bf16.msra.mxu0 %v296
    %336 = vmatmul.bf16.gmra.mxu0 %v194
    %v337 = vpop.f32.mrf.mxu0
    %v338 = vadd.f32 %v230, %v337
    %v339 = vpop.f32.mrf.mxu0
    %340 = vdwg.mxu0
    %341 = vmatpush.bf16.msra.mxu0 %v311
    %342 = vmatpush.bf16.msra.mxu0 %v310
    %343 = vmatpush.bf16.msra.mxu0 %v309
    %344 = vmatpush.bf16.msra.mxu0 %v308
    %345 = vmatpush.bf16.msra.mxu0 %v307
    %346 = vmatpush.bf16.msra.mxu0 %v306
    %347 = vmatpush.bf16.msra.mxu0 %v305
    %348 = vmatpush.bf16.msra.mxu0 %v304
    %349 = vmatmul.bf16.gmra.mxu0 %v195
    %v350 = vpop.f32.mrf.mxu0
    %v351 = vadd.f32 %v338, %v350
    %v352 = vpop.f32.mrf.mxu0
    %353 = vdwg.mxu0
    %v354 = vmul.f32 %v351, 0.5
    %v355 = vtanh.pop %v354
    %v356 = vmul.f32 %v355, 0.5
    %v357 = vadd.f32 %v356, 0.5
    %vm358 = vcmask 785408
    %359 = vst.msk [vmem:[#allocation2] sm:$0xff] %vm358, %v357
    // Predicated region
    $region30: #{tpu_custom_call.1} parent=1 // pred_check
      _
    $region31: #{tpu_custom_call.1} parent=1 // pred_check_branch
      %361 = sbr.rel (0) target = $region33
    $region32: #{tpu_custom_call.1} parent=1 // pred_region
      %363 = vsyncadd [#allocation3], 0
      %s365 = sshll.u32 [#allocation2], 4
      %s366 = int_to_ptr.vmem [resolvable:$true] %s365
      %s367 = sshll.u32 %s7, 4
      %s368 = int_to_ptr.hbm [resolvable:$true] %s367
      %370 = dma.vmem_to_hbm [thread:$0]  %s366, 128, %s368, [#allocation3]
    $region33: #{tpu_custom_call.1} parent=1 // pred_fallthru
      _
    // Predicated region
    $region34: #{tpu_custom_call.1} parent=1 // pred_check
      _
    $region35: #{tpu_custom_call.1} parent=1 // pred_check_branch
      %372 = sbr.rel (0) target = $region37
    $region36: #{tpu_custom_call.1} parent=1 // pred_region
      %374 = dma.done [#allocation3], 128
    $region37: #{tpu_custom_call.1} parent=1 // pred_fallthru
      _
    %375 = vsyncpa [#allocation3], 1

</llo_original>
